<compile_context>
chip_gen: v7x
topology: tpu7x:2x2x1
jax: 0.10.0
libtpu: 0.0.40
codegen_flags: <defaults>
</compile_context>

<pallas_src>
import functools

import jax
import jax.numpy as jnp
from jax import lax
from jax.experimental import pallas as pl
from jax.experimental.pallas import tpu as pltpu


def _basic_block_kernel(x_ref, t1_ref, b1_ref, t2_ref, b2_ref, out_ref, *,
                        mm_dtype):
    """Fused BasicBlock for one sample, fully lane-packed.

    x_ref  : (1, H+4, W*Cin)      packed input with 2 zero halo rows top/bottom
    t1_ref : (3, W*Cin, W*Cout)   conv1 Toeplitz taps (bn1 scale folded)
    b1_ref : (1, W*Cout)          folded bn1 bias, tiled across w
    t2_ref : (3, W*Cout, W*Cout)  conv2 Toeplitz taps (bn2 scale folded)
    b2_ref : (1, W*Cout)
    out_ref: (1, H, W*Cout)       lane-dense packed output
    """
    H = out_ref.shape[1]
    P = b1_ref.shape[1]

    xp = x_ref[0].astype(jnp.float32)            # (H+4, W*Cin)

    def conv3x3(v_pad, t_ref, b_row, n_rows):
        # 3x3 conv with 1-px zero padding on a packed (rows, W*C) slab.
        # v_pad carries one (already zero) halo row above/below the n_rows
        # output rows; column zero-padding is folded into t_ref[dy].
        acc = jnp.dot(v_pad[0:n_rows].astype(mm_dtype), t_ref[0],
                      preferred_element_type=jnp.float32)
        acc = acc + jnp.dot(v_pad[1:n_rows + 1].astype(mm_dtype), t_ref[1],
                            preferred_element_type=jnp.float32)
        acc = acc + jnp.dot(v_pad[2:n_rows + 2].astype(mm_dtype), t_ref[2],
                            preferred_element_type=jnp.float32)
        return acc + b_row

    # ---- conv1 + bn1 + relu, with a 1-row halo so conv2 needs no neighbours.
    h = jnp.maximum(conv3x3(xp, t1_ref, b1_ref[...], H + 2), 0.0)   # (H+2, P)
    # The two halo rows sit outside the image; bias+relu made them nonzero,
    # but conv2 must see zeros there (its implicit zero padding).
    r = lax.broadcasted_iota(jnp.int32, (H + 2, P), 0)
    h = jnp.where(jnp.logical_and(r >= 1, r <= H), h, 0.0)

    # ---- conv2 + bn2 + identity shortcut + relu.
    o = conv3x3(h, t2_ref, b2_ref[...], H) + xp[2:H + 2]
    out_ref[...] = jnp.maximum(o, 0.0).reshape(out_ref.shape).astype(out_ref.dtype)


def _fold_bn(w_oihw, gamma, beta, mean, var, eps=1e-5):
    """Fold inference BatchNorm scale into conv weights; return (w', bias)."""
    s = gamma / jnp.sqrt(var + eps)
    return w_oihw * s[:, None, None, None], beta - mean * s


def _toeplitz_taps(w_oihw, width):
    """(Cout,Cin,3,3) conv weights -> (3, width*Cin, width*Cout) tap matrices.

    T[dy][wi*Cin+ci, wo*Cout+co] = w[co, ci, dy, wi-wo+1] (0 where |wi-wo|>1),
    so `x_row @ T[dy]` applies kernel row dy to a (width*Cin)-packed input row
    and yields a (width*Cout)-packed output row with the 1-pixel column
    zero-padding folded in.
    """
    cout, cin = w_oihw.shape[0], w_oihw.shape[1]
    wi = jnp.arange(width)[:, None]                    # input column
    wo = jnp.arange(width)[None, :]                    # output column
    dx = wi - wo + 1                                   # tap column index
    valid = jnp.logical_and(dx >= 0, dx <= 2)
    dxc = jnp.clip(dx, 0, 2)
    wt = jnp.transpose(w_oihw, (2, 3, 1, 0))           # (dy, dx, Cin, Cout)
    taps = jnp.where(valid[None, :, :, None, None], wt[:, dxc], 0.0)
    taps = jnp.transpose(taps, (0, 1, 3, 2, 4))        # (dy, wi, Cin, wo, Cout)
    return taps.reshape(3, width * cin, width * cout)


def basic_block_forward(x_nchw, params, *, matmul_dtype=jnp.float32):
    """BasicBlock.forward (stride=1, no downsample, inference BN). NCHW in/out."""
    N, Cin, H, W = x_nchw.shape

    w1, b1 = _fold_bn(params["conv1_w"], params["bn1_gamma"], params["bn1_beta"],
                      params["bn1_mean"], params["bn1_var"])
    w2, b2 = _fold_bn(params["conv2_w"], params["bn2_gamma"], params["bn2_beta"],
                      params["bn2_mean"], params["bn2_var"])
    Cout = w1.shape[0]
    assert Cout == Cin, "identity shortcut requires in_planes == planes"

    # Lane-dense packing: NCHW -> (N, H, W*C), then a 2-row zero halo only
    # (column padding is folded into the Toeplitz taps).
    xp = jnp.transpose(x_nchw, (0, 2, 3, 1)).reshape(N, H, W * Cin)
    xp = jnp.pad(xp, ((0, 0), (2, 2), (0, 0)))

    t1 = _toeplitz_taps(w1, W).astype(matmul_dtype)    # (3, W*Cin, W*Cout)
    t2 = _toeplitz_taps(w2, W).astype(matmul_dtype)    # (3, W*Cout, W*Cout)
    b1r = jnp.tile(b1, W)[None, :].astype(jnp.float32)  # (1, W*Cout)
    b2r = jnp.tile(b2, W)[None, :].astype(jnp.float32)

    kernel = functools.partial(_basic_block_kernel, mm_dtype=matmul_dtype)
    out_packed = pl.pallas_call(
        kernel,
        out_shape=jax.ShapeDtypeStruct((N, H, W * Cout), x_nchw.dtype),
        grid=(N,),
        in_specs=[
            pl.BlockSpec((1, H + 4, W * Cin), lambda n: (n, 0, 0)),
            pl.BlockSpec((3, W * Cin, W * Cout), lambda n: (0, 0, 0)),
            pl.BlockSpec((1, W * Cout), lambda n: (0, 0)),
            pl.BlockSpec((3, W * Cout, W * Cout), lambda n: (0, 0, 0)),
            pl.BlockSpec((1, W * Cout), lambda n: (0, 0)),
        ],
        out_specs=pl.BlockSpec((1, H, W * Cout), lambda n: (n, 0, 0)),
        compiler_params=pltpu.CompilerParams(
            dimension_semantics=("parallel",)),
    )(xp, t1, b1r, t2, b2r)

    out = out_packed.reshape(N, H, W, Cout)
    return jnp.transpose(out, (0, 3, 1, 2))            # packed -> NCHW


# ------------------------- pure-JAX reference --------------------------------
def _ref_forward(x_nchw, params):
    x = jnp.transpose(x_nchw, (0, 2, 3, 1))

    def conv(v, w):
        return lax.conv_general_dilated(
            v, w, window_strides=(1, 1), padding=((1, 1), (1, 1)),
            dimension_numbers=("NHWC", "OIHW", "NHWC"),
            precision=lax.Precision.HIGHEST)

    def bn(v, g, b, m, var, eps=1e-5):
        s = g / jnp.sqrt(var + eps)
        return v * s + (b - m * s)

    h = jnp.maximum(bn(conv(x, params["conv1_w"]), params["bn1_gamma"],
                       params["bn1_beta"], params["bn1_mean"],
                       params["bn1_var"]), 0.0)
    o = bn(conv(h, params["conv2_w"]), params["bn2_gamma"],
           params["bn2_beta"], params["bn2_mean"], params["bn2_var"]) + x
    return jnp.transpose(jnp.maximum(o, 0.0), (0, 3, 1, 2))


if __name__ == "__main__":
    N, C, H, W = 2, 8, 16, 16          # in_planes == planes == 8, W*C = 128
    key = jax.random.PRNGKey(0)
    keys = jax.random.split(key, 8)

    x = jax.random.normal(keys[0], (N, C, H, W), jnp.float32)

    fan_in = C * 3 * 3
    params = {
        "conv1_w": jax.random.normal(keys[1], (C, C, 3, 3), jnp.float32)
                   * (2.0 / fan_in) ** 0.5,
        "conv2_w": jax.random.normal(keys[2], (C, C, 3, 3), jnp.float32)
                   * (2.0 / fan_in) ** 0.5,
        "bn1_gamma": 1.0 + 0.1 * jax.random.normal(keys[3], (C,), jnp.float32),
        "bn1_beta": 0.1 * jax.random.normal(keys[4], (C,), jnp.float32),
        "bn1_mean": 0.05 * jax.random.normal(keys[5], (C,), jnp.float32),
        "bn1_var": jnp.abs(1.0 + 0.1 * jax.random.normal(keys[6], (C,),
                                                         jnp.float32)),
        "bn2_gamma": 1.0 + 0.1 * jax.random.normal(keys[7], (C,), jnp.float32),
        "bn2_beta": jnp.linspace(-0.1, 0.1, C, dtype=jnp.float32),
        "bn2_mean": jnp.linspace(-0.05, 0.05, C, dtype=jnp.float32),
        "bn2_var": jnp.linspace(0.9, 1.1, C, dtype=jnp.float32),
    }

    ref = jax.block_until_ready(_ref_forward(x, params))

    # f32 MXU path (exact match to the reference within 1e-3).
    out_f32 = jax.block_until_ready(
        jax.jit(functools.partial(basic_block_forward,
                                  matmul_dtype=jnp.float32))(x, params))
    assert out_f32.shape == (N, C, H, W)
    err32 = float(jnp.max(jnp.abs(out_f32 - ref)))
    assert err32 < 1e-3, f"f32 max abs error {err32}"

    # bf16 MXU operands (v5e/v6e/v7x native MXU dtype), f32 accumulate.
    out_bf16 = jax.block_until_ready(
        jax.jit(functools.partial(basic_block_forward,
                                  matmul_dtype=jnp.bfloat16))(x, params))
    err16 = float(jnp.max(jnp.abs(out_bf16 - ref)))
    assert err16 < 5e-2, f"bf16 max abs error {err16}"

    print("KERNEL_OK")
</pallas_src>

<mosaic_0001>
module attributes {stable_mosaic.version = 11 : i64} {
  func.func @_basic_block_kernel(%arg0: i32, %arg1: memref<1x20x128xf32, #tpu.memory_space<vmem>>, %arg2: memref<3x128x128xf32, #tpu.memory_space<vmem>>, %arg3: memref<1x128xf32, #tpu.memory_space<vmem>>, %arg4: memref<3x128x128xf32, #tpu.memory_space<vmem>>, %arg5: memref<1x128xf32, #tpu.memory_space<vmem>>, %arg6: memref<1x16x128xf32, #tpu.memory_space<vmem>>) attributes {dimension_semantics = [#tpu.dimension_semantics<parallel>], iteration_bounds = array<i64: 2>, scalar_prefetch = 0 : i64, scratch_operands = 0 : i64, tpu.core_type = #tpu.core_type<tc>, window_params = [{transform_indices = @transform_0, window_bounds = array<i64: 1, 20, 128>}, {pipeline_mode = #tpu.pipeline_mode<synchronous>, transform_indices = @transform_1, window_bounds = array<i64: 3, 128, 128>}, {pipeline_mode = #tpu.pipeline_mode<synchronous>, transform_indices = @transform_2, window_bounds = array<i64: 1, 128>}, {pipeline_mode = #tpu.pipeline_mode<synchronous>, transform_indices = @transform_3, window_bounds = array<i64: 3, 128, 128>}, {pipeline_mode = #tpu.pipeline_mode<synchronous>, transform_indices = @transform_4, window_bounds = array<i64: 1, 128>}, {transform_indices = @transform_5, window_bounds = array<i64: 1, 16, 128>}]} {
    %c0 = arith.constant 0 : index
    %c0_0 = arith.constant 0 : index
    %c0_1 = arith.constant 0 : index
    %0 = vector.load %arg1[%c0, %c0_0, %c0_1] : memref<1x20x128xf32, #tpu.memory_space<vmem>>, vector<1x20x128xf32>
    %1 = vector.shape_cast %0 : vector<1x20x128xf32> to vector<20x128xf32>
    %c0_2 = arith.constant 0 : index
    %c0_3 = arith.constant 0 : index
    %2 = vector.load %arg3[%c0_2, %c0_3] : memref<1x128xf32, #tpu.memory_space<vmem>>, vector<1x128xf32>
    %3 = vector.extract_strided_slice %1 {offsets = [0, 0], sizes = [18, 128], strides = [1, 1]} : vector<20x128xf32> to vector<18x128xf32>
    %c0_4 = arith.constant 0 : index
    %c0_5 = arith.constant 0 : index
    %c0_6 = arith.constant 0 : index
    %4 = vector.load %arg2[%c0_4, %c0_5, %c0_6] : memref<3x128x128xf32, #tpu.memory_space<vmem>>, vector<1x128x128xf32>
    %5 = vector.shape_cast %4 : vector<1x128x128xf32> to vector<128x128xf32>
    %cst = arith.constant dense<0.000000e+00> : vector<18x128xf32>
    %6 = tpu.matmul %3, %5, %cst {dimension_numbers = #tpu.dot_dimension_numbers<[1], [0], [0], [1], [0, 0, 1, 1], [], []>} : vector<18x128xf32>, vector<128x128xf32>, vector<18x128xf32> -> vector<18x128xf32>
    %7 = vector.extract_strided_slice %1 {offsets = [1, 0], sizes = [18, 128], strides = [1, 1]} : vector<20x128xf32> to vector<18x128xf32>
    %c1 = arith.constant 1 : index
    %c0_7 = arith.constant 0 : index
    %c0_8 = arith.constant 0 : index
    %8 = vector.load %arg2[%c1, %c0_7, %c0_8] : memref<3x128x128xf32, #tpu.memory_space<vmem>>, vector<1x128x128xf32>
    %9 = vector.shape_cast %8 : vector<1x128x128xf32> to vector<128x128xf32>
    %cst_9 = arith.constant dense<0.000000e+00> : vector<18x128xf32>
    %10 = tpu.matmul %7, %9, %cst_9 {dimension_numbers = #tpu.dot_dimension_numbers<[1], [0], [0], [1], [0, 0, 1, 1], [], []>} : vector<18x128xf32>, vector<128x128xf32>, vector<18x128xf32> -> vector<18x128xf32>
    %11 = arith.addf %6, %10 : vector<18x128xf32>
    %12 = vector.extract_strided_slice %1 {offsets = [2, 0], sizes = [18, 128], strides = [1, 1]} : vector<20x128xf32> to vector<18x128xf32>
    %c2 = arith.constant 2 : index
    %c0_10 = arith.constant 0 : index
    %c0_11 = arith.constant 0 : index
    %13 = vector.load %arg2[%c2, %c0_10, %c0_11] : memref<3x128x128xf32, #tpu.memory_space<vmem>>, vector<1x128x128xf32>
    %14 = vector.shape_cast %13 : vector<1x128x128xf32> to vector<128x128xf32>
    %cst_12 = arith.constant dense<0.000000e+00> : vector<18x128xf32>
    %15 = tpu.matmul %12, %14, %cst_12 {dimension_numbers = #tpu.dot_dimension_numbers<[1], [0], [0], [1], [0, 0, 1, 1], [], []>} : vector<18x128xf32>, vector<128x128xf32>, vector<18x128xf32> -> vector<18x128xf32>
    %16 = arith.addf %11, %15 : vector<18x128xf32>
    %17 = vector.broadcast %2 : vector<1x128xf32> to vector<18x128xf32>
    %18 = arith.addf %16, %17 : vector<18x128xf32>
    %cst_13 = arith.constant 0.000000e+00 : f32
    %19 = vector.broadcast %cst_13 : f32 to vector<18x128xf32>
    %20 = arith.maximumf %18, %19 : vector<18x128xf32>
    %21 = tpu.iota {dimensions = array<i32: 0>} : vector<18x128xi32>
    %c1_i32 = arith.constant 1 : i32
    %22 = vector.broadcast %c1_i32 : i32 to vector<18x128xi32>
    %23 = arith.cmpi sge, %21, %22 : vector<18x128xi32>
    %c16_i32 = arith.constant 16 : i32
    %24 = vector.broadcast %c16_i32 : i32 to vector<18x128xi32>
    %25 = arith.cmpi sle, %21, %24 : vector<18x128xi32>
    %26 = arith.andi %23, %25 : vector<18x128xi1>
    %cst_14 = arith.constant 0.000000e+00 : f32
    %27 = vector.broadcast %cst_14 : f32 to vector<18x128xf32>
    %28 = arith.select %26, %20, %27 : vector<18x128xi1>, vector<18x128xf32>
    %c0_15 = arith.constant 0 : index
    %c0_16 = arith.constant 0 : index
    %29 = vector.load %arg5[%c0_15, %c0_16] : memref<1x128xf32, #tpu.memory_space<vmem>>, vector<1x128xf32>
    %30 = vector.extract_strided_slice %28 {offsets = [0, 0], sizes = [16, 128], strides = [1, 1]} : vector<18x128xf32> to vector<16x128xf32>
    %c0_17 = arith.constant 0 : index
    %c0_18 = arith.constant 0 : index
    %c0_19 = arith.constant 0 : index
    %31 = vector.load %arg4[%c0_17, %c0_18, %c0_19] : memref<3x128x128xf32, #tpu.memory_space<vmem>>, vector<1x128x128xf32>
    %32 = vector.shape_cast %31 : vector<1x128x128xf32> to vector<128x128xf32>
    %cst_20 = arith.constant dense<0.000000e+00> : vector<16x128xf32>
    %33 = tpu.matmul %30, %32, %cst_20 {dimension_numbers = #tpu.dot_dimension_numbers<[1], [0], [0], [1], [0, 0, 1, 1], [], []>} : vector<16x128xf32>, vector<128x128xf32>, vector<16x128xf32> -> vector<16x128xf32>
    %34 = vector.extract_strided_slice %28 {offsets = [1, 0], sizes = [16, 128], strides = [1, 1]} : vector<18x128xf32> to vector<16x128xf32>
    %c1_21 = arith.constant 1 : index
    %c0_22 = arith.constant 0 : index
    %c0_23 = arith.constant 0 : index
    %35 = vector.load %arg4[%c1_21, %c0_22, %c0_23] : memref<3x128x128xf32, #tpu.memory_space<vmem>>, vector<1x128x128xf32>
    %36 = vector.shape_cast %35 : vector<1x128x128xf32> to vector<128x128xf32>
    %cst_24 = arith.constant dense<0.000000e+00> : vector<16x128xf32>
    %37 = tpu.matmul %34, %36, %cst_24 {dimension_numbers = #tpu.dot_dimension_numbers<[1], [0], [0], [1], [0, 0, 1, 1], [], []>} : vector<16x128xf32>, vector<128x128xf32>, vector<16x128xf32> -> vector<16x128xf32>
    %38 = arith.addf %33, %37 : vector<16x128xf32>
    %39 = vector.extract_strided_slice %28 {offsets = [2, 0], sizes = [16, 128], strides = [1, 1]} : vector<18x128xf32> to vector<16x128xf32>
    %c2_25 = arith.constant 2 : index
    %c0_26 = arith.constant 0 : index
    %c0_27 = arith.constant 0 : index
    %40 = vector.load %arg4[%c2_25, %c0_26, %c0_27] : memref<3x128x128xf32, #tpu.memory_space<vmem>>, vector<1x128x128xf32>
    %41 = vector.shape_cast %40 : vector<1x128x128xf32> to vector<128x128xf32>
    %cst_28 = arith.constant dense<0.000000e+00> : vector<16x128xf32>
    %42 = tpu.matmul %39, %41, %cst_28 {dimension_numbers = #tpu.dot_dimension_numbers<[1], [0], [0], [1], [0, 0, 1, 1], [], []>} : vector<16x128xf32>, vector<128x128xf32>, vector<16x128xf32> -> vector<16x128xf32>
    %43 = arith.addf %38, %42 : vector<16x128xf32>
    %44 = vector.broadcast %29 : vector<1x128xf32> to vector<16x128xf32>
    %45 = arith.addf %43, %44 : vector<16x128xf32>
    %46 = vector.extract_strided_slice %1 {offsets = [2, 0], sizes = [16, 128], strides = [1, 1]} : vector<20x128xf32> to vector<16x128xf32>
    %47 = arith.addf %45, %46 : vector<16x128xf32>
    %cst_29 = arith.constant 0.000000e+00 : f32
    %48 = vector.broadcast %cst_29 : f32 to vector<16x128xf32>
    %49 = arith.maximumf %47, %48 : vector<16x128xf32>
    %50 = vector.shape_cast %49 : vector<16x128xf32> to vector<1x16x128xf32>
    %c0_30 = arith.constant 0 : index
    %c0_31 = arith.constant 0 : index
    %c0_32 = arith.constant 0 : index
    %51 = vector.load %arg6[%c0_30, %c0_31, %c0_32] : memref<1x16x128xf32, #tpu.memory_space<vmem>>, vector<1x16x128xf32>
    tpu.vector_store %arg6[%c0_30, %c0_31, %c0_32], %50 {strides = array<i32>} : memref<1x16x128xf32, #tpu.memory_space<vmem>>, vector<1x16x128xf32>,
    return
  }
  func.func @transform_0(%arg0: i32) -> (i32, i32, i32) {
    %c0_i32 = arith.constant 0 : i32
    %c0_i32_0 = arith.constant 0 : i32
    %c0_i32_1 = arith.constant 0 : i32
    return %arg0, %c0_i32, %c0_i32_0 : i32, i32, i32
  }
  func.func @transform_1(%arg0: i32) -> (i32, i32, i32) {
    %c0_i32 = arith.constant 0 : i32
    %c0_i32_0 = arith.constant 0 : i32
    %c0_i32_1 = arith.constant 0 : i32
    %c0_i32_2 = arith.constant 0 : i32
    return %c0_i32, %c0_i32_0, %c0_i32_1 : i32, i32, i32
  }
  func.func @transform_2(%arg0: i32) -> (i32, i32) {
    %c0_i32 = arith.constant 0 : i32
    %c0_i32_0 = arith.constant 0 : i32
    %c0_i32_1 = arith.constant 0 : i32
    return %c0_i32, %c0_i32_0 : i32, i32
  }
  func.func @transform_3(%arg0: i32) -> (i32, i32, i32) {
    %c0_i32 = arith.constant 0 : i32
    %c0_i32_0 = arith.constant 0 : i32
    %c0_i32_1 = arith.constant 0 : i32
    %c0_i32_2 = arith.constant 0 : i32
    return %c0_i32, %c0_i32_0, %c0_i32_1 : i32, i32, i32
  }
  func.func @transform_4(%arg0: i32) -> (i32, i32) {
    %c0_i32 = arith.constant 0 : i32
    %c0_i32_0 = arith.constant 0 : i32
    %c0_i32_1 = arith.constant 0 : i32
    return %c0_i32, %c0_i32_0 : i32, i32
  }
  func.func @transform_5(%arg0: i32) -> (i32, i32, i32) {
    %c0_i32 = arith.constant 0 : i32
    %c0_i32_0 = arith.constant 0 : i32
    %c0_i32_1 = arith.constant 0 : i32
    return %arg0, %c0_i32, %c0_i32_0 : i32, i32, i32
  }
}

</mosaic_0001>

<llo_original>
// kernel: tile.13
$region0: #{tile.13}
  #allocation0 [shape = 's32[1]{0}', space=sflag, size = 0x4, scoped, tag = 'scoped memory for tile.13']
  %s0 = inlined_call_operand.vmem [shape: f32[8], index: 0, kind: input, shape index: {}]
  %s1 = inlined_call_operand.vmem [shape: f32[16,8], index: 1, kind: output, shape index: {}]
  // Predicated region
  $region2: #{tile.13} parent=0 // pred_check
    _
  $region3: #{tile.13} parent=0 // pred_check_branch
    %3 = sbr.rel (0) target = $region5
  $region4: #{tile.13} parent=0 // pred_region
    _
  $region5: #{tile.13} parent=0 // pred_fallthru
    _
  %v4 = vld [vmem:[%s0] ss:$0 sm:$0xff]
  %5 = vst [vmem:[%s1] sm:$0xff] %v4
  %s6 = scalar_lea.vmem %s1, 8
  %7 = vst [vmem:[%s6] sm:$0xff] %v4

// kernel: tile.14
$region0: #{tile.14}
  %s0 = inlined_call_operand.vmem [shape: f32[16,8], index: 0, kind: input, shape index: {}]
  %s1 = inlined_call_operand.vmem [shape: f32[1,128], index: 1, kind: output, shape index: {}]
  $region1: #{tile.14} parent=0
    #allocation0 [shape = 'u8[4096]{0}', space=vmem, size = 0x1000, scoped, tag = 'scoped mem for output reshape']
    %v2 = vld [vmem:[%s0] sm:$0x1]
    %vm3 = vcmask 64512
    %4 = vst.msk [vmem:[#allocation0] sm:$0x1] %vm3, %v2
    %s5 = scalar_lea.vmem %s0, 15
    %v6 = vld [vmem:[%s5] sm:$0x1]
    %7 = vrot.lane.b32.xlu0 %v6, 120
    %v8 = vpop.permute.xlu0 %7
    %vm9 = vcmask 1048512
    %10 = vst.msk [vmem:[#allocation0] sm:$0x1] %vm9, %v8
    %s11 = scalar_lea.vmem %s0, 14
    %v12 = vld [vmem:[%s11] sm:$0x1]
    %13 = vrot.lane.b32.xlu0 %v12, 112
    %v14 = vpop.permute.xlu0 %13
    %vm15 = vcmask 982912
    %16 = vst.msk [vmem:[#allocation0] sm:$0x1] %vm15, %v14
    %s17 = scalar_lea.vmem %s0, 13
    %v18 = vld [vmem:[%s17] sm:$0x1]
    %19 = vrot.lane.b32.xlu0 %v18, 104
    %v20 = vpop.permute.xlu0 %19
    %vm21 = vcmask 917312
    %22 = vst.msk [vmem:[#allocation0] sm:$0x1] %vm21, %v20
    %s23 = scalar_lea.vmem %s0, 12
    %v24 = vld [vmem:[%s23] sm:$0x1]
    %25 = vrot.lane.b32.xlu0 %v24, 96
    %v26 = vpop.permute.xlu0 %25
    %vm27 = vcmask 851712
    %28 = vst.msk [vmem:[#allocation0] sm:$0x1] %vm27, %v26
    %s29 = scalar_lea.vmem %s0, 11
    %v30 = vld [vmem:[%s29] sm:$0x1]
    %31 = vrot.lane.b32.xlu0 %v30, 88
    %v32 = vpop.permute.xlu0 %31
    %vm33 = vcmask 786112
    %34 = vst.msk [vmem:[#allocation0] sm:$0x1] %vm33, %v32
    %s35 = scalar_lea.vmem %s0, 10
    %v36 = vld [vmem:[%s35] sm:$0x1]
    %37 = vrot.lane.b32.xlu0 %v36, 80
    %v38 = vpop.permute.xlu0 %37
    %vm39 = vcmask 720512
    %40 = vst.msk [vmem:[#allocation0] sm:$0x1] %vm39, %v38
    %s41 = scalar_lea.vmem %s0, 9
    %v42 = vld [vmem:[%s41] sm:$0x1]
    %43 = vrot.lane.b32.xlu0 %v42, 72
    %v44 = vpop.permute.xlu0 %43
    %vm45 = vcmask 654912
    %46 = vst.msk [vmem:[#allocation0] sm:$0x1] %vm45, %v44
    %s47 = scalar_lea.vmem %s0, 8
    %v48 = vld [vmem:[%s47] sm:$0x1]
    %49 = vrot.lane.b32.xlu0 %v48, 64
    %v50 = vpop.permute.xlu0 %49
    %vm51 = vcmask 589312
    %52 = vst.msk [vmem:[#allocation0] sm:$0x1] %vm51, %v50
    %s53 = scalar_lea.vmem %s0, 7
    %v54 = vld [vmem:[%s53] sm:$0x1]
    %55 = vrot.lane.b32.xlu0 %v54, 56
    %v56 = vpop.permute.xlu0 %55
    %vm57 = vcmask 523712
    %58 = vst.msk [vmem:[#allocation0] sm:$0x1] %vm57, %v56
    %s59 = scalar_lea.vmem %s0, 6
    %v60 = vld [vmem:[%s59] sm:$0x1]
    %61 = vrot.lane.b32.xlu0 %v60, 48
    %v62 = vpop.permute.xlu0 %61
    %vm63 = vcmask 458112
    %64 = vst.msk [vmem:[#allocation0] sm:$0x1] %vm63, %v62
    %s65 = scalar_lea.vmem %s0, 5
    %v66 = vld [vmem:[%s65] sm:$0x1]
    %67 = vrot.lane.b32.xlu0 %v66, 40
    %v68 = vpop.permute.xlu0 %67
    %vm69 = vcmask 392512
    %70 = vst.msk [vmem:[#allocation0] sm:$0x1] %vm69, %v68
    %s71 = scalar_lea.vmem %s0, 4
    %v72 = vld [vmem:[%s71] sm:$0x1]
    %73 = vrot.lane.b32.xlu0 %v72, 32
    %v74 = vpop.permute.xlu0 %73
    %vm75 = vcmask 326912
    %76 = vst.msk [vmem:[#allocation0] sm:$0x1] %vm75, %v74
    %s77 = scalar_lea.vmem %s0, 3
    %v78 = vld [vmem:[%s77] sm:$0x1]
    %79 = vrot.lane.b32.xlu0 %v78, 24
    %v80 = vpop.permute.xlu0 %79
    %vm81 = vcmask 261312
    %82 = vst.msk [vmem:[#allocation0] sm:$0x1] %vm81, %v80
    %s83 = scalar_lea.vmem %s0, 2
    %v84 = vld [vmem:[%s83] sm:$0x1]
    %85 = vrot.lane.b32.xlu0 %v84, 16
    %v86 = vpop.permute.xlu0 %85
    %vm87 = vcmask 195712
    %88 = vst.msk [vmem:[#allocation0] sm:$0x1] %vm87, %v86
    %s89 = scalar_lea.vmem %s0, 1
    %v90 = vld [vmem:[%s89] sm:$0x1]
    %91 = vrot.lane.b32.xlu0 %v90, 8
    %v92 = vpop.permute.xlu0 %91
    %vm93 = vcmask 130112
    %94 = vst.msk [vmem:[#allocation0] sm:$0x1] %vm93, %v92
    %s96 = sshllo.u32 0, 1
    %v98 = vld [vmem:[#allocation0] sm:%s96]
    %s99 = sshllo.u32 0, 1
    %100 = vst [vmem:[%s1] sm:%s99] %v98

// kernel: basic_block_forward.1
$region0: #{basic_block_forward.1}
  #allocation0 [shape = 'u32[]', space=smem, size = 0x4, offset = 0x4, fixed_abs, tag = 'smem constant byte address 0x4 - core index']
  #allocation1 [shape = 'u32[144,128]{1,0:T(1,128)}', space=vmem, size = 0x12000, scoped, tag = 'internal scratch']
  %s0 = inlined_call_operand.vmem [shape: f32[2,20,128], index: 0, kind: input, shape index: {}]
  %s1 = inlined_call_operand.vmem [shape: f32[3,128,128], index: 1, kind: input, shape index: {}]
  %s2 = inlined_call_operand.vmem [shape: f32[1,128], index: 2, kind: input, shape index: {}]
  %s3 = inlined_call_operand.vmem [shape: f32[3,128,128], index: 3, kind: input, shape index: {}]
  %s4 = inlined_call_operand.vmem [shape: f32[1,128], index: 4, kind: input, shape index: {}]
  %s5 = inlined_call_operand.vmem [shape: f32[2,16,128], index: 5, kind: output, shape index: {}]
  %s6 = sld [smem:[#allocation0]]
  $region53: #{basic_block_forward.1} parent=0
    _
  %s8 = ssub.s32 1, %s6
  %s9 = scalar_select 0, %s8, %s6
  loop: start=0, step=1, limit=4
  $region2: #{basic_block_forward.1} parent=0 // loop_pre_header
    _
  $region3: #{basic_block_forward.1} parent=0 // loop_header
    %s11 = sphi 0, %s15
    %p12 = scmp.ge.s32.totalorder %s11, 4
    %s21 = sphi 0, %s23
    %s24 = sphi 0, %s21
    %s25 = sphi 0, %s24
    %s41 = sphi 0, %s25
    %s45 = sphi 0, %s45
    %s47 = sphi 0, %s45
    %s48 = sphi 0, %s47
    %s62 = sphi 0, %s48
    %s66 = sphi 0, %s66
    %s68 = sphi 0, %s66
    %s69 = sphi 0, %s68
    %s83 = sphi 0, %s69
    %s87 = sphi 0, %s87
    %s89 = sphi 0, %s87
    %s90 = sphi 0, %s89
    %s104 = sphi 0, %s90
    %s108 = sphi 0, %s108
    %s110 = sphi 0, %s108
    %s111 = sphi 0, %s110
    %s125 = sphi 0, %s111
    %s131 = sphi 0, %s133
    %s134 = sphi 0, %s131
    %s135 = sphi 0, %s134
    %s151 = sphi 0, %s135
  $region4: #{basic_block_forward.1} parent=0 // loop_header_branch
    %14 = sbr.rel (%p12) target = $region8
  $region5: #{basic_block_forward.1} parent=0 // loop_body
    %s16 = ssub.s32 %s11, 1
    %s17 = ssub.s32 %s11, 2
    %s18 = sadd.s32 %s11, 1
    %s19 = ssub.s32 %s11, %s18
    %p20 = scmp.eq.s32.totalorder %s19, 0
    %s22 = sadd.s32 %s21, 1
    %s23 = scalar_select %p20, %s21, %s22
    %p26 = pneg %p20
    %p27 = scmp.eq.s32.totalorder %s11, 1
    %p28 = por %p26, %p27
    %p29 = scmp.ne.s32.totalorder %s21, %s24
    %p30 = scmp.eq.s32.totalorder %s11, 0
    %p31 = por %p29, %p30
    %p32 = scmp.ne.s32.totalorder %s21, %s24
    %p33 = scmp.eq.s32.totalorder %s16, 1
    %p34 = por %p32, %p33
    %p35 = scmp.ne.s32.totalorder %s24, %s25
    %p36 = scmp.eq.s32.totalorder %s16, 0
    %p37 = por %p35, %p36
    %p38 = scmp.ne.s32.totalorder %s24, %s25
    %p39 = scmp.eq.s32.totalorder %s17, 1
    %p40 = por %p38, %p39
    %p42 = scmp.ne.s32.totalorder %s25, %s41
    %p43 = scmp.eq.s32.totalorder %s17, 0
    %p44 = por %p42, %p43
    %s46 = sadd.s32 %s45, 1
    %p49 = scmp.eq.s32.totalorder %s11, 1
    %p50 = scmp.ne.s32.totalorder %s45, %s47
    %p51 = scmp.eq.s32.totalorder %s11, 0
    %p52 = por %p50, %p51
    %p53 = scmp.ne.s32.totalorder %s45, %s47
    %p54 = scmp.eq.s32.totalorder %s16, 1
    %p55 = por %p53, %p54
    %p56 = scmp.ne.s32.totalorder %s47, %s48
    %p57 = scmp.eq.s32.totalorder %s16, 0
    %p58 = por %p56, %p57
    %p59 = scmp.ne.s32.totalorder %s47, %s48
    %p60 = scmp.eq.s32.totalorder %s17, 1
    %p61 = por %p59, %p60
    %p63 = scmp.ne.s32.totalorder %s48, %s62
    %p64 = scmp.eq.s32.totalorder %s17, 0
    %p65 = por %p63, %p64
    %s67 = sadd.s32 %s66, 1
    %p70 = scmp.eq.s32.totalorder %s11, 1
    %p71 = scmp.ne.s32.totalorder %s66, %s68
    %p72 = scmp.eq.s32.totalorder %s11, 0
    %p73 = por %p71, %p72
    %p74 = scmp.ne.s32.totalorder %s66, %s68
    %p75 = scmp.eq.s32.totalorder %s16, 1
    %p76 = por %p74, %p75
    %p77 = scmp.ne.s32.totalorder %s68, %s69
    %p78 = scmp.eq.s32.totalorder %s16, 0
    %p79 = por %p77, %p78
    %p80 = scmp.ne.s32.totalorder %s68, %s69
    %p81 = scmp.eq.s32.totalorder %s17, 1
    %p82 = por %p80, %p81
    %p84 = scmp.ne.s32.totalorder %s69, %s83
    %p85 = scmp.eq.s32.totalorder %s17, 0
    %p86 = por %p84, %p85
    %s88 = sadd.s32 %s87, 1
    %p91 = scmp.eq.s32.totalorder %s11, 1
    %p92 = scmp.ne.s32.totalorder %s87, %s89
    %p93 = scmp.eq.s32.totalorder %s11, 0
    %p94 = por %p92, %p93
    %p95 = scmp.ne.s32.totalorder %s87, %s89
    %p96 = scmp.eq.s32.totalorder %s16, 1
    %p97 = por %p95, %p96
    %p98 = scmp.ne.s32.totalorder %s89, %s90
    %p99 = scmp.eq.s32.totalorder %s16, 0
    %p100 = por %p98, %p99
    %p101 = scmp.ne.s32.totalorder %s89, %s90
    %p102 = scmp.eq.s32.totalorder %s17, 1
    %p103 = por %p101, %p102
    %p105 = scmp.ne.s32.totalorder %s90, %s104
    %p106 = scmp.eq.s32.totalorder %s17, 0
    %p107 = por %p105, %p106
    %s109 = sadd.s32 %s108, 1
    %p112 = scmp.eq.s32.totalorder %s11, 1
    %p113 = scmp.ne.s32.totalorder %s108, %s110
    %p114 = scmp.eq.s32.totalorder %s11, 0
    %p115 = por %p113, %p114
    %p116 = scmp.ne.s32.totalorder %s108, %s110
    %p117 = scmp.eq.s32.totalorder %s16, 1
    %p118 = por %p116, %p117
    %p119 = scmp.ne.s32.totalorder %s110, %s111
    %p120 = scmp.eq.s32.totalorder %s16, 0
    %p121 = por %p119, %p120
    %p122 = scmp.ne.s32.totalorder %s110, %s111
    %p123 = scmp.eq.s32.totalorder %s17, 1
    %p124 = por %p122, %p123
    %p126 = scmp.ne.s32.totalorder %s111, %s125
    %p127 = scmp.eq.s32.totalorder %s17, 0
    %p128 = por %p126, %p127
    %s129 = ssub.s32 %s11, %s18
    %p130 = scmp.eq.s32.totalorder %s129, 0
    %s132 = sadd.s32 %s131, 1
    %s133 = scalar_select %p130, %s131, %s132
    %p136 = pneg %p130
    %p137 = scmp.eq.s32.totalorder %s11, 1
    %p138 = por %p136, %p137
    %p139 = scmp.ne.s32.totalorder %s131, %s134
    %p140 = scmp.eq.s32.totalorder %s11, 0
    %p141 = por %p139, %p140
    %p142 = scmp.ne.s32.totalorder %s131, %s134
    %p143 = scmp.eq.s32.totalorder %s16, 1
    %p144 = por %p142, %p143
    %p145 = scmp.ne.s32.totalorder %s134, %s135
    %p146 = scmp.eq.s32.totalorder %s16, 0
    %p147 = por %p145, %p146
    %p148 = scmp.ne.s32.totalorder %s134, %s135
    %p149 = scmp.eq.s32.totalorder %s17, 1
    %p150 = por %p148, %p149
    %p152 = scmp.ne.s32.totalorder %s135, %s151
    %p153 = scmp.eq.s32.totalorder %s17, 0
    %p154 = por %p152, %p153
    %p155 = scmp.le.s32.totalorder 1, %s11
    %p156 = scmp.lt.s32.totalorder %s11, 3
    %p157 = pnand %p155, %p156
    %p158 = pneg %p157
    // Predicated region
    $region9: #{basic_block_forward.1} parent=5 // pred_check
      _
    $region10: #{basic_block_forward.1} parent=5 // pred_check_branch
      %160 = sbr.rel (%p157) target = $region12
    $region11: #{basic_block_forward.1} parent=5 // pred_region
      %s161 = ssub.s32 %s11, 1
      // Predicated region
      $region13: #{basic_block_forward.1} parent=11 // pred_check
        %p162 = pneg %p58
      $region14: #{basic_block_forward.1} parent=11 // pred_check_branch
        %164 = sbr.rel (%p162) target = $region16
      $region15: #{basic_block_forward.1} parent=11 // pred_region
        _
      $region16: #{basic_block_forward.1} parent=11 // pred_fallthru
        _
      // Predicated region
      $region17: #{basic_block_forward.1} parent=11 // pred_check
        %p165 = pneg %p79
      $region18: #{basic_block_forward.1} parent=11 // pred_check_branch
        %167 = sbr.rel (%p165) target = $region20
      $region19: #{basic_block_forward.1} parent=11 // pred_region
        _
      $region20: #{basic_block_forward.1} parent=11 // pred_fallthru
        _
      // Predicated region
      $region21: #{basic_block_forward.1} parent=11 // pred_check
        %p168 = pneg %p100
      $region22: #{basic_block_forward.1} parent=11 // pred_check_branch
        %170 = sbr.rel (%p168) target = $region24
      $region23: #{basic_block_forward.1} parent=11 // pred_region
        _
      $region24: #{basic_block_forward.1} parent=11 // pred_fallthru
        _
      // Predicated region
      $region25: #{basic_block_forward.1} parent=11 // pred_check
        %p171 = pneg %p121
      $region26: #{basic_block_forward.1} parent=11 // pred_check_branch
        %173 = sbr.rel (%p171) target = $region28
      $region27: #{basic_block_forward.1} parent=11 // pred_region
        _
      $region28: #{basic_block_forward.1} parent=11 // pred_fallthru
        _
    $region12: #{basic_block_forward.1} parent=5 // pred_fallthru
      _
    %p174 = scmp.lt.s32.totalorder %s11, 2
    // Predicated region
    $region29: #{basic_block_forward.1} parent=5 // pred_check
      %p175 = pneg %p174
    $region30: #{basic_block_forward.1} parent=5 // pred_check_branch
      %177 = sbr.rel (%p175) target = $region32
    $region31: #{basic_block_forward.1} parent=5 // pred_region
      // Predicated region
      $region33: #{basic_block_forward.1} parent=31 // pred_check
        %p178 = pneg %p31
      $region34: #{basic_block_forward.1} parent=31 // pred_check_branch
        %180 = sbr.rel (%p178) target = $region36
      $region35: #{basic_block_forward.1} parent=31 // pred_region
        %p181 = scmp.lt.s32.totalorder %s11, 1
        %s182 = scalar_select %p181, %s11, 1
        %s183 = smul.addr %s182, 3
        %s184 = smul.addr %s183, 8
        %s185 = scalar_lea.vmem %s0, %s184
      $region36: #{basic_block_forward.1} parent=31 // pred_fallthru
        _
    $region32: #{basic_block_forward.1} parent=5 // pred_fallthru
      _
    %p186 = scmp.le.s32.totalorder 1, %s11
    %p187 = scmp.lt.s32.totalorder %s11, 3
    %p188 = pnand %p186, %p187
    %p189 = pneg %p188
    // Predicated region
    $region37: #{basic_block_forward.1} parent=5 // pred_check
      _
    $region38: #{basic_block_forward.1} parent=5 // pred_check_branch
      %191 = sbr.rel (%p188) target = $region40
    $region39: #{basic_block_forward.1} parent=5 // pred_region
      %s192 = ssub.s32 %s11, 1
      %p193 = scmp.lt.s32.totalorder %s16, 1
      %s194 = scalar_select %p193, %s16, 1
      %s195 = smul.addr %s194, 3
      %s196 = smul.addr %s195, 8
      %s197 = scalar_lea.vmem %s0, %s196
      %p198 = pneg %p37
      %p199 = pneg %p34
      %p200 = pneg %p58
      %p201 = pneg %p55
      %p202 = pneg %p79
      %p203 = pneg %p76
      %p204 = pneg %p100
      %p205 = pneg %p97
      %p206 = pneg %p121
      %p207 = pneg %p118
      %p208 = pneg %p147
      %p209 = pneg %p144
      %p210 = scmp.lt.s32.totalorder %s16, 1
      %s211 = scalar_select %p210, %s16, 1
      %s212 = smul.addr %s211, 2
      %s213 = smul.addr %s212, 8
      %s214 = scalar_lea.vmem %s5, %s213
      %p215 = scmp.lt.s32.totalorder %s16, 1
      %s216 = scalar_select %p215, %s16, 1
      %s217 = smul.addr %s216, 3
      %s218 = smul.addr %s217, 8
      %s219 = scalar_lea.vmem %s0, %s218
      %p220 = scmp.lt.s32.totalorder %s16, 1
      %s221 = scalar_select %p220, %s16, 1
      %s222 = smul.addr %s221, 2
      %s223 = smul.addr %s222, 8
      %s224 = scalar_lea.vmem %s5, %s223
      %v225 = vld [vmem:[%s219] sm:$0xff]
      %v226 = vld [vmem:[%s219 + $0x8] sm:$0xff]
      %v227 = vld [vmem:[%s219 + $0x10] sm:$0xf]
      %v228 = vld [vmem:[%s2] sm:$0x1]
      %v229 = vld [vmem:[%s1] sm:$0xff]
      %v230 = vld [vmem:[%s1 + $0x8] sm:$0xff]
      %v231 = vld [vmem:[%s1 + $0x10] sm:$0xff]
      %v232 = vld [vmem:[%s1 + $0x18] sm:$0xff]
      %v233 = vld [vmem:[%s1 + $0x20] sm:$0xff]
      %v234 = vld [vmem:[%s1 + $0x28] sm:$0xff]
      %v235 = vld [vmem:[%s1 + $0x30] sm:$0xff]
      %v236 = vld [vmem:[%s1 + $0x38] sm:$0xff]
      %v237 = vld [vmem:[%s1 + $0x40] sm:$0xff]
      %v238 = vld [vmem:[%s1 + $0x48] sm:$0xff]
      %v239 = vld [vmem:[%s1 + $0x50] sm:$0xff]
      %v240 = vld [vmem:[%s1 + $0x58] sm:$0xff]
      %v241 = vld [vmem:[%s1 + $0x60] sm:$0xff]
      %v242 = vld [vmem:[%s1 + $0x68] sm:$0xff]
      %v243 = vld [vmem:[%s1 + $0x70] sm:$0xff]
      %v244 = vld [vmem:[%s1 + $0x78] sm:$0xff]
      %s245 = scalar_lea.vmem %s1, 128
      %v246 = vld [vmem:[%s245] sm:$0xff]
      %v247 = vld [vmem:[%s245 + $0x8] sm:$0xff]
      %v248 = vld [vmem:[%s245 + $0x10] sm:$0xff]
      %v249 = vld [vmem:[%s245 + $0x18] sm:$0xff]
      %v250 = vld [vmem:[%s245 + $0x20] sm:$0xff]
      %v251 = vld [vmem:[%s245 + $0x28] sm:$0xff]
      %v252 = vld [vmem:[%s245 + $0x30] sm:$0xff]
      %v253 = vld [vmem:[%s245 + $0x38] sm:$0xff]
      %v254 = vld [vmem:[%s245 + $0x40] sm:$0xff]
      %v255 = vld [vmem:[%s245 + $0x48] sm:$0xff]
      %v256 = vld [vmem:[%s245 + $0x50] sm:$0xff]
      %v257 = vld [vmem:[%s245 + $0x58] sm:$0xff]
      %v258 = vld [vmem:[%s245 + $0x60] sm:$0xff]
      %v259 = vld [vmem:[%s245 + $0x68] sm:$0xff]
      %v260 = vld [vmem:[%s245 + $0x70] sm:$0xff]
      %v261 = vld [vmem:[%s245 + $0x78] sm:$0xff]
      %vm265 = vcmask 1046528
      %v266 = vrot.slane %v225, 1
      %v267 = vrot.slane %v226, 1
      %v268 = vsel %vm265, %v266, %v267
      %v269 = vrot.slane %v227, 1
      %v270 = vsel %vm265, %v267, %v269
      %274 = vmatprep.subr.mxu0 0.0
      %275 = vmatpush1.msra.mxu0 %v246
      %276 = vmatprep.subr.mxu0 0.0
      %277 = vmatpush1.msra.mxu0 %v247
      %278 = vmatprep.subr.mxu0 0.0
      %279 = vmatpush1.msra.mxu0 %v248
      %280 = vmatprep.subr.mxu0 0.0
      %281 = vmatpush1.msra.mxu0 %v249
      %282 = vmatprep.subr.mxu0 0.0
      %283 = vmatpush1.msra.mxu0 %v250
      %284 = vmatprep.subr.mxu0 0.0
      %285 = vmatpush1.msra.mxu0 %v251
      %286 = vmatprep.subr.mxu0 0.0
      %287 = vmatpush1.msra.mxu0 %v252
      %288 = vmatprep.subr.mxu0 0.0
      %289 = vmatpush1.msra.mxu0 %v253
      %290 = vmatprep.subr.mxu0 0.0
      %291 = vmatpush1.msra.mxu0 %v254
      %292 = vmatprep.subr.mxu0 0.0
      %293 = vmatpush1.msra.mxu0 %v255
      %294 = vmatprep.subr.mxu0 0.0
      %295 = vmatpush1.msra.mxu0 %v256
      %296 = vmatprep.subr.mxu0 0.0
      %297 = vmatpush1.msra.mxu0 %v257
      %298 = vmatprep.subr.mxu0 0.0
      %299 = vmatpush1.msra.mxu0 %v258
      %300 = vmatprep.subr.mxu0 0.0
      %301 = vmatpush1.msra.mxu0 %v259
      %302 = vmatprep.subr.mxu0 0.0
      %303 = vmatpush1.msra.mxu0 %v260
      %304 = vmatprep.subr.mxu0 0.0
      %305 = vmatpush1.msra.mxu0 %v261
      %306 = vmatprep.subr.mxu0 0.0
      %307 = vmatpush1.msra.mxu0 0.0
      %308 = vmatprep.subr.mxu0 0.0
      %309 = vmatpush1.msra.mxu0 0.0
      %310 = vmatprep.subr.mxu0 0.0
      %311 = vmatpush1.msra.mxu0 0.0
      %312 = vmatprep.subr.mxu0 0.0
      %313 = vmatpush1.msra.mxu0 0.0
      %314 = vmatprep.subr.mxu0 0.0
      %315 = vmatpush1.msra.mxu0 0.0
      %316 = vmatprep.subr.mxu0 0.0
      %317 = vmatpush1.msra.mxu0 0.0
      %318 = vmatprep.subr.mxu0 0.0
      %319 = vmatpush1.msra.mxu0 0.0
      %320 = vmatprep.subr.mxu0 0.0
      %321 = vmatpush1.msra.mxu0 0.0
      %322 = vmatprep.subr.mxu0 0.0
      %323 = vmatpush1.msra.mxu0 0.0
      %324 = vmatprep.subr.mxu0 0.0
      %325 = vmatpush1.msra.mxu0 0.0
      %326 = vmatprep.subr.mxu0 0.0
      %327 = vmatpush1.msra.mxu0 0.0
      %328 = vmatprep.subr.mxu0 0.0
      %329 = vmatpush1.msra.mxu0 0.0
      %330 = vmatprep.subr.mxu0 0.0
      %331 = vmatpush1.msra.mxu0 0.0
      %332 = vmatprep.subr.mxu0 0.0
      %333 = vmatpush1.msra.mxu0 0.0
      %334 = vmatprep.subr.mxu0 0.0
      %335 = vmatpush1.msra.mxu0 0.0
      %336 = vmatprep.subr.mxu0 0.0
      %337 = vmatpush1.msra.mxu0 0.0
      %338 = vmatprep.mubr.f32.mxu0 0.0
      %339 = vmatmul.mubr.f32.gmra.mrb[0].mxu0 %v268
      %v340 = vpop.f32.mrb[0].mxu0
      %v341 = vadd.f32 0.0, %v340
      %v342 = vpop.f32.mrb[0].mxu0
      %343 = vmatprep.mubr.f32.mxu0 0.0
      %344 = vmatmul.mubr.f32.gmra.mrb[0].mxu0 %v270
      %v345 = vpop.f32.mrb[0].mxu0
      %v346 = vadd.f32 0.0, %v345
      %v347 = vpop.f32.mrb[0].mxu0
      %348 = vmatprep.mubr.f32.mxu0 0.0
      %349 = vmatmul.mubr.f32.gmra.mrb[0].mxu0 %v269
      %v350 = vpop.f32.mrb[0].mxu0
      %v351 = vadd.f32 0.0, %v350
      %v352 = vpop.f32.mrb[0].mxu0
      %353 = vdwg.mxu0
      %354 = vmatprep.subr.mxu0 0.0
      %355 = vmatpush1.msra.mxu0 %v229
      %356 = vmatprep.subr.mxu0 0.0
      %357 = vmatpush1.msra.mxu0 %v230
      %358 = vmatprep.subr.mxu0 0.0
      %359 = vmatpush1.msra.mxu0 %v231
      %360 = vmatprep.subr.mxu0 0.0
      %361 = vmatpush1.msra.mxu0 %v232
      %362 = vmatprep.subr.mxu0 0.0
      %363 = vmatpush1.msra.mxu0 %v233
      %364 = vmatprep.subr.mxu0 0.0
      %365 = vmatpush1.msra.mxu0 %v234
      %366 = vmatprep.subr.mxu0 0.0
      %367 = vmatpush1.msra.mxu0 %v235
      %368 = vmatprep.subr.mxu0 0.0
      %369 = vmatpush1.msra.mxu0 %v236
      %370 = vmatprep.subr.mxu0 0.0
      %371 = vmatpush1.msra.mxu0 %v237
      %372 = vmatprep.subr.mxu0 0.0
      %373 = vmatpush1.msra.mxu0 %v238
      %374 = vmatprep.subr.mxu0 0.0
      %375 = vmatpush1.msra.mxu0 %v239
      %376 = vmatprep.subr.mxu0 0.0
      %377 = vmatpush1.msra.mxu0 %v240
      %378 = vmatprep.subr.mxu0 0.0
      %379 = vmatpush1.msra.mxu0 %v241
      %380 = vmatprep.subr.mxu0 0.0
      %381 = vmatpush1.msra.mxu0 %v242
      %382 = vmatprep.subr.mxu0 0.0
      %383 = vmatpush1.msra.mxu0 %v243
      %384 = vmatprep.subr.mxu0 0.0
      %385 = vmatpush1.msra.mxu0 %v244
      %386 = vmatprep.subr.mxu0 0.0
      %387 = vmatpush1.msra.mxu0 0.0
      %388 = vmatprep.subr.mxu0 0.0
      %389 = vmatpush1.msra.mxu0 0.0
      %390 = vmatprep.subr.mxu0 0.0
      %391 = vmatpush1.msra.mxu0 0.0
      %392 = vmatprep.subr.mxu0 0.0
      %393 = vmatpush1.msra.mxu0 0.0
      %394 = vmatprep.subr.mxu0 0.0
      %395 = vmatpush1.msra.mxu0 0.0
      %396 = vmatprep.subr.mxu0 0.0
      %397 = vmatpush1.msra.mxu0 0.0
      %398 = vmatprep.subr.mxu0 0.0
      %399 = vmatpush1.msra.mxu0 0.0
      %400 = vmatprep.subr.mxu0 0.0
      %401 = vmatpush1.msra.mxu0 0.0
      %402 = vmatprep.subr.mxu0 0.0
      %403 = vmatpush1.msra.mxu0 0.0
      %404 = vmatprep.subr.mxu0 0.0
      %405 = vmatpush1.msra.mxu0 0.0
      %406 = vmatprep.subr.mxu0 0.0
      %407 = vmatpush1.msra.mxu0 0.0
      %408 = vmatprep.subr.mxu0 0.0
      %409 = vmatpush1.msra.mxu0 0.0
      %410 = vmatprep.subr.mxu0 0.0
      %411 = vmatpush1.msra.mxu0 0.0
      %412 = vmatprep.subr.mxu0 0.0
      %413 = vmatpush1.msra.mxu0 0.0
      %414 = vmatprep.subr.mxu0 0.0
      %415 = vmatpush1.msra.mxu0 0.0
      %416 = vmatprep.subr.mxu0 0.0
      %417 = vmatpush1.msra.mxu0 0.0
      %418 = vmatprep.mubr.f32.mxu0 0.0
      %419 = vmatmul.mubr.f32.gmra.mrb[0].mxu0 %v225
      %v420 = vpop.f32.mrb[0].mxu0
      %v421 = vadd.f32 %v341, %v420
      %v422 = vpop.f32.mrb[0].mxu0
      %423 = vmatprep.mubr.f32.mxu0 0.0
      %424 = vmatmul.mubr.f32.gmra.mrb[0].mxu0 %v226
      %v425 = vpop.f32.mrb[0].mxu0
      %v426 = vadd.f32 %v346, %v425
      %v427 = vpop.f32.mrb[0].mxu0
      %428 = vmatprep.mubr.f32.mxu0 0.0
      %429 = vmatmul.mubr.f32.gmra.mrb[0].mxu0 %v227
      %v430 = vpop.f32.mrb[0].mxu0
      %v431 = vadd.f32 %v351, %v430
      %v432 = vpop.f32.mrb[0].mxu0
      %433 = vdwg.mxu0
      %s434 = scalar_lea.vmem %s1, 256
      %v435 = vld [vmem:[%s434] sm:$0xff]
      %v436 = vld [vmem:[%s434 + $0x8] sm:$0xff]
      %v437 = vld [vmem:[%s434 + $0x10] sm:$0xff]
      %v438 = vld [vmem:[%s434 + $0x18] sm:$0xff]
      %v439 = vld [vmem:[%s434 + $0x20] sm:$0xff]
      %v440 = vld [vmem:[%s434 + $0x28] sm:$0xff]
      %v441 = vld [vmem:[%s434 + $0x30] sm:$0xff]
      %v442 = vld [vmem:[%s434 + $0x38] sm:$0xff]
      %v443 = vld [vmem:[%s434 + $0x40] sm:$0xff]
      %v444 = vld [vmem:[%s434 + $0x48] sm:$0xff]
      %v445 = vld [vmem:[%s434 + $0x50] sm:$0xff]
      %v446 = vld [vmem:[%s434 + $0x58] sm:$0xff]
      %v447 = vld [vmem:[%s434 + $0x60] sm:$0xff]
      %v448 = vld [vmem:[%s434 + $0x68] sm:$0xff]
      %v449 = vld [vmem:[%s434 + $0x70] sm:$0xff]
      %v450 = vld [vmem:[%s434 + $0x78] sm:$0xff]
      %vm451 = vcmask 1045504
      %v452 = vrot.slane %v225, 2
      %v453 = vrot.slane %v226, 2
      %v454 = vsel %vm451, %v452, %v453
      %v455 = vrot.slane %v227, 2
      %v456 = vsel %vm451, %v453, %v455
      %460 = vmatprep.subr.mxu0 0.0
      %461 = vmatpush1.msra.mxu0 %v435
      %462 = vmatprep.subr.mxu0 0.0
      %463 = vmatpush1.msra.mxu0 %v436
      %464 = vmatprep.subr.mxu0 0.0
      %465 = vmatpush1.msra.mxu0 %v437
      %466 = vmatprep.subr.mxu0 0.0
      %467 = vmatpush1.msra.mxu0 %v438
      %468 = vmatprep.subr.mxu0 0.0
      %469 = vmatpush1.msra.mxu0 %v439
      %470 = vmatprep.subr.mxu0 0.0
      %471 = vmatpush1.msra.mxu0 %v440
      %472 = vmatprep.subr.mxu0 0.0
      %473 = vmatpush1.msra.mxu0 %v441
      %474 = vmatprep.subr.mxu0 0.0
      %475 = vmatpush1.msra.mxu0 %v442
      %476 = vmatprep.subr.mxu0 0.0
      %477 = vmatpush1.msra.mxu0 %v443
      %478 = vmatprep.subr.mxu0 0.0
      %479 = vmatpush1.msra.mxu0 %v444
      %480 = vmatprep.subr.mxu0 0.0
      %481 = vmatpush1.msra.mxu0 %v445
      %482 = vmatprep.subr.mxu0 0.0
      %483 = vmatpush1.msra.mxu0 %v446
      %484 = vmatprep.subr.mxu0 0.0
      %485 = vmatpush1.msra.mxu0 %v447
      %486 = vmatprep.subr.mxu0 0.0
      %487 = vmatpush1.msra.mxu0 %v448
      %488 = vmatprep.subr.mxu0 0.0
      %489 = vmatpush1.msra.mxu0 %v449
      %490 = vmatprep.subr.mxu0 0.0
      %491 = vmatpush1.msra.mxu0 %v450
      %492 = vmatprep.subr.mxu0 0.0
      %493 = vmatpush1.msra.mxu0 0.0
      %494 = vmatprep.subr.mxu0 0.0
      %495 = vmatpush1.msra.mxu0 0.0
      %496 = vmatprep.subr.mxu0 0.0
      %497 = vmatpush1.msra.mxu0 0.0
      %498 = vmatprep.subr.mxu0 0.0
      %499 = vmatpush1.msra.mxu0 0.0
      %500 = vmatprep.subr.mxu0 0.0
      %501 = vmatpush1.msra.mxu0 0.0
      %502 = vmatprep.subr.mxu0 0.0
      %503 = vmatpush1.msra.mxu0 0.0
      %504 = vmatprep.subr.mxu0 0.0
      %505 = vmatpush1.msra.mxu0 0.0
      %506 = vmatprep.subr.mxu0 0.0
      %507 = vmatpush1.msra.mxu0 0.0
      %508 = vmatprep.subr.mxu0 0.0
      %509 = vmatpush1.msra.mxu0 0.0
      %510 = vmatprep.subr.mxu0 0.0
      %511 = vmatpush1.msra.mxu0 0.0
      %512 = vmatprep.subr.mxu0 0.0
      %513 = vmatpush1.msra.mxu0 0.0
      %514 = vmatprep.subr.mxu0 0.0
      %515 = vmatpush1.msra.mxu0 0.0
      %516 = vmatprep.subr.mxu0 0.0
      %517 = vmatpush1.msra.mxu0 0.0
      %518 = vmatprep.subr.mxu0 0.0
      %519 = vmatpush1.msra.mxu0 0.0
      %520 = vmatprep.subr.mxu0 0.0
      %521 = vmatpush1.msra.mxu0 0.0
      %522 = vmatprep.subr.mxu0 0.0
      %523 = vmatpush1.msra.mxu0 0.0
      %524 = vmatprep.mubr.f32.mxu0 0.0
      %525 = vmatmul.mubr.f32.gmra.mrb[0].mxu0 %v454
      %v526 = vpop.f32.mrb[0].mxu0
      %v527 = vadd.f32 0.0, %v526
      %v528 = vpop.f32.mrb[0].mxu0
      %529 = vmatprep.mubr.f32.mxu0 0.0
      %530 = vmatmul.mubr.f32.gmra.mrb[0].mxu0 %v456
      %v531 = vpop.f32.mrb[0].mxu0
      %v532 = vadd.f32 0.0, %v531
      %v533 = vpop.f32.mrb[0].mxu0
      %534 = vmatprep.mubr.f32.mxu0 0.0
      %535 = vmatmul.mubr.f32.gmra.mrb[0].mxu0 %v455
      %v536 = vpop.f32.mrb[0].mxu0
      %v537 = vadd.f32 0.0, %v536
      %v538 = vpop.f32.mrb[0].mxu0
      %539 = vdwg.mxu0
      %v540 = vadd.f32 %v421, %v527
      %v541 = vadd.f32 %v426, %v532
      %v542 = vadd.f32 %v431, %v537
      %v544 = vlaneseq
      %v545 = vshrl.u32 %v544, 7
      %v546 = vsub.s32 0, %v545
      %v547 = vrot.slane %v228, %v546
      %v549 = vadd.f32 %v540, %v547
      %v550 = vadd.f32 %v541, %v547
      %v551 = vadd.f32 %v542, %v547
      %v552 = vmax.f32 %v549, 0.0
      %v553 = vmax.f32 %v550, 0.0
      %v554 = vmax.f32 %v551, 0.0
      %v555 = vlaneseq
      %v556 = vshrl.u32 %v555, 7
      %v557 = vadd.s32 %v556, 8
      %v558 = vadd.s32 %v556, 16
      %vm559 = vcmp.ge.s32.totalorder %v556, 1
      %vm560 = vcmp.ge.s32.totalorder %v557, 1
      %vm561 = vcmp.ge.s32.totalorder %v558, 1
      %vm562 = vcmp.le.s32.totalorder %v556, 16
      %vm563 = vcmp.le.s32.totalorder %v557, 16
      %vm564 = vcmp.le.s32.totalorder %v558, 16
      %vm565 = vmand %vm559, %vm562
      %vm566 = vmand %vm560, %vm563
      %vm567 = vmand %vm561, %vm564
      %v568 = vsel %vm565, %v552, 0.0
      %v569 = vsel %vm566, %v553, 0.0
      %v570 = vsel %vm567, %v554, 0.0
      %v571 = vld [vmem:[%s4] sm:$0x1]
      %v572 = vld [vmem:[%s3] sm:$0xff]
      %v573 = vld [vmem:[%s3 + $0x8] sm:$0xff]
      %v574 = vld [vmem:[%s3 + $0x10] sm:$0xff]
      %v575 = vld [vmem:[%s3 + $0x18] sm:$0xff]
      %v576 = vld [vmem:[%s3 + $0x20] sm:$0xff]
      %v577 = vld [vmem:[%s3 + $0x28] sm:$0xff]
      %v578 = vld [vmem:[%s3 + $0x30] sm:$0xff]
      %v579 = vld [vmem:[%s3 + $0x38] sm:$0xff]
      %v580 = vld [vmem:[%s3 + $0x40] sm:$0xff]
      %v581 = vld [vmem:[%s3 + $0x48] sm:$0xff]
      %v582 = vld [vmem:[%s3 + $0x50] sm:$0xff]
      %v583 = vld [vmem:[%s3 + $0x58] sm:$0xff]
      %v584 = vld [vmem:[%s3 + $0x60] sm:$0xff]
      %v585 = vld [vmem:[%s3 + $0x68] sm:$0xff]
      %v586 = vld [vmem:[%s3 + $0x70] sm:$0xff]
      %v587 = vld [vmem:[%s3 + $0x78] sm:$0xff]
      %s588 = scalar_lea.vmem %s3, 128
      %v589 = vld [vmem:[%s588] sm:$0xff]
      %v590 = vld [vmem:[%s588 + $0x8] sm:$0xff]
      %v591 = vld [vmem:[%s588 + $0x10] sm:$0xff]
      %v592 = vld [vmem:[%s588 + $0x18] sm:$0xff]
      %v593 = vld [vmem:[%s588 + $0x20] sm:$0xff]
      %v594 = vld [vmem:[%s588 + $0x28] sm:$0xff]
      %v595 = vld [vmem:[%s588 + $0x30] sm:$0xff]
      %v596 = vld [vmem:[%s588 + $0x38] sm:$0xff]
      %v597 = vld [vmem:[%s588 + $0x40] sm:$0xff]
      %v598 = vld [vmem:[%s588 + $0x48] sm:$0xff]
      %v599 = vld [vmem:[%s588 + $0x50] sm:$0xff]
      %v600 = vld [vmem:[%s588 + $0x58] sm:$0xff]
      %v601 = vld [vmem:[%s588 + $0x60] sm:$0xff]
      %v602 = vld [vmem:[%s588 + $0x68] sm:$0xff]
      %v603 = vld [vmem:[%s588 + $0x70] sm:$0xff]
      %v604 = vld [vmem:[%s588 + $0x78] sm:$0xff]
      %v608 = vrot.slane %v568, 1
      %v609 = vrot.slane %v569, 1
      %v610 = vsel %vm265, %v608, %v609
      %v611 = vrot.slane %v570, 1
      %v612 = vsel %vm265, %v609, %v611
      %615 = vmatprep.subr.mxu0 0.0
      %616 = vmatpush1.msra.mxu0 %v589
      %617 = vmatprep.subr.mxu0 0.0
      %618 = vmatpush1.msra.mxu0 %v590
      %619 = vmatprep.subr.mxu0 0.0
      %620 = vmatpush1.msra.mxu0 %v591
      %621 = vmatprep.subr.mxu0 0.0
      %622 = vmatpush1.msra.mxu0 %v592
      %623 = vmatprep.subr.mxu0 0.0
      %624 = vmatpush1.msra.mxu0 %v593
      %625 = vmatprep.subr.mxu0 0.0
      %626 = vmatpush1.msra.mxu0 %v594
      %627 = vmatprep.subr.mxu0 0.0
      %628 = vmatpush1.msra.mxu0 %v595
      %629 = vmatprep.subr.mxu0 0.0
      %630 = vmatpush1.msra.mxu0 %v596
      %631 = vmatprep.subr.mxu0 0.0
      %632 = vmatpush1.msra.mxu0 %v597
      %633 = vmatprep.subr.mxu0 0.0
      %634 = vmatpush1.msra.mxu0 %v598
      %635 = vmatprep.subr.mxu0 0.0
      %636 = vmatpush1.msra.mxu0 %v599
      %637 = vmatprep.subr.mxu0 0.0
      %638 = vmatpush1.msra.mxu0 %v600
      %639 = vmatprep.subr.mxu0 0.0
      %640 = vmatpush1.msra.mxu0 %v601
      %641 = vmatprep.subr.mxu0 0.0
      %642 = vmatpush1.msra.mxu0 %v602
      %643 = vmatprep.subr.mxu0 0.0
      %644 = vmatpush1.msra.mxu0 %v603
      %645 = vmatprep.subr.mxu0 0.0
      %646 = vmatpush1.msra.mxu0 %v604
      %647 = vmatprep.subr.mxu0 0.0
      %648 = vmatpush1.msra.mxu0 0.0
      %649 = vmatprep.subr.mxu0 0.0
      %650 = vmatpush1.msra.mxu0 0.0
      %651 = vmatprep.subr.mxu0 0.0
      %652 = vmatpush1.msra.mxu0 0.0
      %653 = vmatprep.subr.mxu0 0.0
      %654 = vmatpush1.msra.mxu0 0.0
      %655 = vmatprep.subr.mxu0 0.0
      %656 = vmatpush1.msra.mxu0 0.0
      %657 = vmatprep.subr.mxu0 0.0
      %658 = vmatpush1.msra.mxu0 0.0
      %659 = vmatprep.subr.mxu0 0.0
      %660 = vmatpush1.msra.mxu0 0.0
      %661 = vmatprep.subr.mxu0 0.0
      %662 = vmatpush1.msra.mxu0 0.0
      %663 = vmatprep.subr.mxu0 0.0
      %664 = vmatpush1.msra.mxu0 0.0
      %665 = vmatprep.subr.mxu0 0.0
      %666 = vmatpush1.msra.mxu0 0.0
      %667 = vmatprep.subr.mxu0 0.0
      %668 = vmatpush1.msra.mxu0 0.0
      %669 = vmatprep.subr.mxu0 0.0
      %670 = vmatpush1.msra.mxu0 0.0
      %671 = vmatprep.subr.mxu0 0.0
      %672 = vmatpush1.msra.mxu0 0.0
      %673 = vmatprep.subr.mxu0 0.0
      %674 = vmatpush1.msra.mxu0 0.0
      %675 = vmatprep.subr.mxu0 0.0
      %676 = vmatpush1.msra.mxu0 0.0
      %677 = vmatprep.subr.mxu0 0.0
      %678 = vmatpush1.msra.mxu0 0.0
      %679 = vmatprep.mubr.f32.mxu0 0.0
      %680 = vmatmul.mubr.f32.gmra.mrb[0].mxu0 %v610
      %v681 = vpop.f32.mrb[0].mxu0
      %v682 = vadd.f32 0.0, %v681
      %v683 = vpop.f32.mrb[0].mxu0
      %684 = vmatprep.mubr.f32.mxu0 0.0
      %685 = vmatmul.mubr.f32.gmra.mrb[0].mxu0 %v612
      %v686 = vpop.f32.mrb[0].mxu0
      %v687 = vadd.f32 0.0, %v686
      %v688 = vpop.f32.mrb[0].mxu0
      %689 = vdwg.mxu0
      %690 = vmatprep.subr.mxu0 0.0
      %691 = vmatpush1.msra.mxu0 %v572
      %692 = vmatprep.subr.mxu0 0.0
      %693 = vmatpush1.msra.mxu0 %v573
      %694 = vmatprep.subr.mxu0 0.0
      %695 = vmatpush1.msra.mxu0 %v574
      %696 = vmatprep.subr.mxu0 0.0
      %697 = vmatpush1.msra.mxu0 %v575
      %698 = vmatprep.subr.mxu0 0.0
      %699 = vmatpush1.msra.mxu0 %v576
      %700 = vmatprep.subr.mxu0 0.0
      %701 = vmatpush1.msra.mxu0 %v577
      %702 = vmatprep.subr.mxu0 0.0
      %703 = vmatpush1.msra.mxu0 %v578
      %704 = vmatprep.subr.mxu0 0.0
      %705 = vmatpush1.msra.mxu0 %v579
      %706 = vmatprep.subr.mxu0 0.0
      %707 = vmatpush1.msra.mxu0 %v580
      %708 = vmatprep.subr.mxu0 0.0
      %709 = vmatpush1.msra.mxu0 %v581
      %710 = vmatprep.subr.mxu0 0.0
      %711 = vmatpush1.msra.mxu0 %v582
      %712 = vmatprep.subr.mxu0 0.0
      %713 = vmatpush1.msra.mxu0 %v583
      %714 = vmatprep.subr.mxu0 0.0
      %715 = vmatpush1.msra.mxu0 %v584
      %716 = vmatprep.subr.mxu0 0.0
      %717 = vmatpush1.msra.mxu0 %v585
      %718 = vmatprep.subr.mxu0 0.0
      %719 = vmatpush1.msra.mxu0 %v586
      %720 = vmatprep.subr.mxu0 0.0
      %721 = vmatpush1.msra.mxu0 %v587
      %722 = vmatprep.subr.mxu0 0.0
      %723 = vmatpush1.msra.mxu0 0.0
      %724 = vmatprep.subr.mxu0 0.0
      %725 = vmatpush1.msra.mxu0 0.0
      %726 = vmatprep.subr.mxu0 0.0
      %727 = vmatpush1.msra.mxu0 0.0
      %728 = vmatprep.subr.mxu0 0.0
      %729 = vmatpush1.msra.mxu0 0.0
      %730 = vmatprep.subr.mxu0 0.0
      %731 = vmatpush1.msra.mxu0 0.0
      %732 = vmatprep.subr.mxu0 0.0
      %733 = vmatpush1.msra.mxu0 0.0
      %734 = vmatprep.subr.mxu0 0.0
      %735 = vmatpush1.msra.mxu0 0.0
      %736 = vmatprep.subr.mxu0 0.0
      %737 = vmatpush1.msra.mxu0 0.0
      %738 = vmatprep.subr.mxu0 0.0
      %739 = vmatpush1.msra.mxu0 0.0
      %740 = vmatprep.subr.mxu0 0.0
      %741 = vmatpush1.msra.mxu0 0.0
      %742 = vmatprep.subr.mxu0 0.0
      %743 = vmatpush1.msra.mxu0 0.0
      %744 = vmatprep.subr.mxu0 0.0
      %745 = vmatpush1.msra.mxu0 0.0
      %746 = vmatprep.subr.mxu0 0.0
      %747 = vmatpush1.msra.mxu0 0.0
      %748 = vmatprep.subr.mxu0 0.0
      %749 = vmatpush1.msra.mxu0 0.0
      %750 = vmatprep.subr.mxu0 0.0
      %751 = vmatpush1.msra.mxu0 0.0
      %752 = vmatprep.subr.mxu0 0.0
      %753 = vmatpush1.msra.mxu0 0.0
      %754 = vmatprep.mubr.f32.mxu0 0.0
      %755 = vmatmul.mubr.f32.gmra.mrb[0].mxu0 %v568
      %v756 = vpop.f32.mrb[0].mxu0
      %v757 = vadd.f32 %v682, %v756
      %v758 = vpop.f32.mrb[0].mxu0
      %759 = vmatprep.mubr.f32.mxu0 0.0
      %760 = vmatmul.mubr.f32.gmra.mrb[0].mxu0 %v569
      %v761 = vpop.f32.mrb[0].mxu0
      %v762 = vadd.f32 %v687, %v761
      %v763 = vpop.f32.mrb[0].mxu0
      %764 = vdwg.mxu0
      %s765 = scalar_lea.vmem %s3, 256
      %v766 = vld [vmem:[%s765] sm:$0xff]
      %v767 = vld [vmem:[%s765 + $0x8] sm:$0xff]
      %v768 = vld [vmem:[%s765 + $0x10] sm:$0xff]
      %v769 = vld [vmem:[%s765 + $0x18] sm:$0xff]
      %v770 = vld [vmem:[%s765 + $0x20] sm:$0xff]
      %v771 = vld [vmem:[%s765 + $0x28] sm:$0xff]
      %v772 = vld [vmem:[%s765 + $0x30] sm:$0xff]
      %v773 = vld [vmem:[%s765 + $0x38] sm:$0xff]
      %v774 = vld [vmem:[%s765 + $0x40] sm:$0xff]
      %v775 = vld [vmem:[%s765 + $0x48] sm:$0xff]
      %v776 = vld [vmem:[%s765 + $0x50] sm:$0xff]
      %v777 = vld [vmem:[%s765 + $0x58] sm:$0xff]
      %v778 = vld [vmem:[%s765 + $0x60] sm:$0xff]
      %v779 = vld [vmem:[%s765 + $0x68] sm:$0xff]
      %v780 = vld [vmem:[%s765 + $0x70] sm:$0xff]
      %v781 = vld [vmem:[%s765 + $0x78] sm:$0xff]
      %v782 = vrot.slane %v568, 2
      %v783 = vrot.slane %v569, 2
      %v784 = vsel %vm451, %v782, %v783
      %v785 = vrot.slane %v570, 2
      %v786 = vsel %vm451, %v783, %v785
      %789 = vmatprep.subr.mxu0 0.0
      %790 = vmatpush1.msra.mxu0 %v766
      %791 = vmatprep.subr.mxu0 0.0
      %792 = vmatpush1.msra.mxu0 %v767
      %793 = vmatprep.subr.mxu0 0.0
      %794 = vmatpush1.msra.mxu0 %v768
      %795 = vmatprep.subr.mxu0 0.0
      %796 = vmatpush1.msra.mxu0 %v769
      %797 = vmatprep.subr.mxu0 0.0
      %798 = vmatpush1.msra.mxu0 %v770
      %799 = vmatprep.subr.mxu0 0.0
      %800 = vmatpush1.msra.mxu0 %v771
      %801 = vmatprep.subr.mxu0 0.0
      %802 = vmatpush1.msra.mxu0 %v772
      %803 = vmatprep.subr.mxu0 0.0
      %804 = vmatpush1.msra.mxu0 %v773
      %805 = vmatprep.subr.mxu0 0.0
      %806 = vmatpush1.msra.mxu0 %v774
      %807 = vmatprep.subr.mxu0 0.0
      %808 = vmatpush1.msra.mxu0 %v775
      %809 = vmatprep.subr.mxu0 0.0
      %810 = vmatpush1.msra.mxu0 %v776
      %811 = vmatprep.subr.mxu0 0.0
      %812 = vmatpush1.msra.mxu0 %v777
      %813 = vmatprep.subr.mxu0 0.0
      %814 = vmatpush1.msra.mxu0 %v778
      %815 = vmatprep.subr.mxu0 0.0
      %816 = vmatpush1.msra.mxu0 %v779
      %817 = vmatprep.subr.mxu0 0.0
      %818 = vmatpush1.msra.mxu0 %v780
      %819 = vmatprep.subr.mxu0 0.0
      %820 = vmatpush1.msra.mxu0 %v781
      %821 = vmatprep.subr.mxu0 0.0
      %822 = vmatpush1.msra.mxu0 0.0
      %823 = vmatprep.subr.mxu0 0.0
      %824 = vmatpush1.msra.mxu0 0.0
      %825 = vmatprep.subr.mxu0 0.0
      %826 = vmatpush1.msra.mxu0 0.0
      %827 = vmatprep.subr.mxu0 0.0
      %828 = vmatpush1.msra.mxu0 0.0
      %829 = vmatprep.subr.mxu0 0.0
      %830 = vmatpush1.msra.mxu0 0.0
      %831 = vmatprep.subr.mxu0 0.0
      %832 = vmatpush1.msra.mxu0 0.0
      %833 = vmatprep.subr.mxu0 0.0
      %834 = vmatpush1.msra.mxu0 0.0
      %835 = vmatprep.subr.mxu0 0.0
      %836 = vmatpush1.msra.mxu0 0.0
      %837 = vmatprep.subr.mxu0 0.0
      %838 = vmatpush1.msra.mxu0 0.0
      %839 = vmatprep.subr.mxu0 0.0
      %840 = vmatpush1.msra.mxu0 0.0
      %841 = vmatprep.subr.mxu0 0.0
      %842 = vmatpush1.msra.mxu0 0.0
      %843 = vmatprep.subr.mxu0 0.0
      %844 = vmatpush1.msra.mxu0 0.0
      %845 = vmatprep.subr.mxu0 0.0
      %846 = vmatpush1.msra.mxu0 0.0
      %847 = vmatprep.subr.mxu0 0.0
      %848 = vmatpush1.msra.mxu0 0.0
      %849 = vmatprep.subr.mxu0 0.0
      %850 = vmatpush1.msra.mxu0 0.0
      %851 = vmatprep.subr.mxu0 0.0
      %852 = vmatpush1.msra.mxu0 0.0
      %853 = vmatprep.mubr.f32.mxu0 0.0
      %854 = vmatmul.mubr.f32.gmra.mrb[0].mxu0 %v784
      %v855 = vpop.f32.mrb[0].mxu0
      %v856 = vadd.f32 0.0, %v855
      %v857 = vpop.f32.mrb[0].mxu0
      %858 = vmatprep.mubr.f32.mxu0 0.0
      %859 = vmatmul.mubr.f32.gmra.mrb[0].mxu0 %v786
      %v860 = vpop.f32.mrb[0].mxu0
      %v861 = vadd.f32 0.0, %v860
      %v862 = vpop.f32.mrb[0].mxu0
      %863 = vdwg.mxu0
      %v864 = vadd.f32 %v757, %v856
      %v865 = vadd.f32 %v762, %v861
      %v867 = vlaneseq
      %v868 = vshrl.u32 %v867, 7
      %v869 = vsub.s32 0, %v868
      %v870 = vrot.slane %v571, %v869
      %v872 = vadd.f32 %v864, %v870
      %v873 = vadd.f32 %v865, %v870
      %v874 = vadd.f32 %v872, %v454
      %v875 = vadd.f32 %v873, %v456
      %v876 = vmax.f32 %v874, 0.0
      %v877 = vmax.f32 %v875, 0.0
      %878 = vst [vmem:[%s224] sm:$0xff] %v876
      %879 = vst [vmem:[%s224 + $0x8] sm:$0xff] %v877
      %p880 = scmp.lt.s32.totalorder %s16, 1
      %s881 = scalar_select %p880, %s16, 1
      %s882 = smul.addr %s881, 2
      %s883 = smul.addr %s882, 8
      %s884 = scalar_lea.vmem %s5, %s883
      // Predicated region
      $region41: #{basic_block_forward.1} parent=39 // pred_check
        %p885 = pneg %p144
      $region42: #{basic_block_forward.1} parent=39 // pred_check_branch
        %887 = sbr.rel (%p885) target = $region44
      $region43: #{basic_block_forward.1} parent=39 // pred_region
        _
      $region44: #{basic_block_forward.1} parent=39 // pred_fallthru
        _
    $region40: #{basic_block_forward.1} parent=5 // pred_fallthru
      _
    %p888 = scmp.le.s32.totalorder 2, %s11
    // Predicated region
    $region45: #{basic_block_forward.1} parent=5 // pred_check
      %p889 = pneg %p888
    $region46: #{basic_block_forward.1} parent=5 // pred_check_branch
      %891 = sbr.rel (%p889) target = $region48
    $region47: #{basic_block_forward.1} parent=5 // pred_region
      %s892 = ssub.s32 %s11, 2
      // Predicated region
      $region49: #{basic_block_forward.1} parent=47 // pred_check
        %p893 = pneg %p150
      $region50: #{basic_block_forward.1} parent=47 // pred_check_branch
        %895 = sbr.rel (%p893) target = $region52
      $region51: #{basic_block_forward.1} parent=47 // pred_region
        %p896 = scmp.lt.s32.totalorder %s17, 1
        %s897 = scalar_select %p896, %s17, 1
        %s898 = smul.addr %s897, 2
        %s899 = smul.addr %s898, 8
        %s900 = scalar_lea.vmem %s5, %s899
      $region52: #{basic_block_forward.1} parent=47 // pred_fallthru
        _
    $region48: #{basic_block_forward.1} parent=5 // pred_fallthru
      _
  $region6: #{basic_block_forward.1} parent=0 // loop_footer
    %s15 = sadd.s32 1, %s11
  $region7: #{basic_block_forward.1} parent=0 // loop_footer_branch
    %10 = sbr.rel target = $region3
  $region8: #{basic_block_forward.1} parent=0 // loop_exit
    _

</llo_original>
